<compile_context>
chip_gen: v5e
topology: v5e:2x2
jax: 0.10.0
libtpu: 0.0.40
codegen_flags: <defaults>
</compile_context>

<pallas_src>
import functools

import jax
import jax.numpy as jnp
from jax.experimental import pallas as pl
from jax.experimental.pallas import tpu as pltpu


# ----------------------------- reference math --------------------------------

def _linear(x, w, b):
    return jnp.dot(x, w, preferred_element_type=jnp.float32) + b


def _mlp(x, layers):
    """MLP: ReLU after every layer except the last. layers = [(W, b), ...]."""
    h = x
    for (w, b) in layers[:-1]:
        h = jnp.maximum(_linear(h, w, b), 0.0)
    w, b = layers[-1]
    return _linear(h, w, b)


def _flow_mlp(x, t, layers):
    """FlowMLP: first layer acts on concat([x, t]); weight stored split as
    (W0x, W0t, b0). ReLU after all but last layer."""
    w0x, w0t, b0 = layers[0]
    h = jnp.maximum(
        jnp.dot(x, w0x, preferred_element_type=jnp.float32) + t * w0t + b0, 0.0)
    for (w, b) in layers[1:-1]:
        h = jnp.maximum(_linear(h, w, b), 0.0)
    w, b = layers[-1]
    return _linear(h, w, b)


def poly_mlp_nvp_reference(x, t, params, order):
    mlp1_p, mlp2_p, ms_p, ts_p = params
    half = x.shape[1] // 2
    xa, xb = x[:, :half], x[:, half:]
    m1 = _mlp(xa, mlp1_p)
    m2 = _mlp(xb, mlp2_p)
    out1 = jnp.zeros_like(m1)
    out2 = jnp.zeros_like(m2)
    for k in range(order + 1):
        out1 = out1 + m1 ** k * _flow_mlp(xb, t, ms_p[k])
        out2 = out2 + m2 ** k * _flow_mlp(xa, t, ts_p[k])
    return jnp.concatenate([out1, out2], axis=1)


# ---------------------------- weight packing ----------------------------------

def _block_diag(blocks):
    rows = sum(b.shape[0] for b in blocks)
    cols = sum(b.shape[1] for b in blocks)
    out = jnp.zeros((rows, cols), dtype=blocks[0].dtype)
    r = c = 0
    for b in blocks:
        out = out.at[r:r + b.shape[0], c:c + b.shape[1]].set(b)
        r += b.shape[0]
        c += b.shape[1]
    return out


def pack_flownet_params(params, matmul_dtype=jnp.float32):
    """Fuse all 2*(order+2) sub-MLPs into a single wide/block-diagonal stack
    stored TRANSPOSED for the batch-on-lanes kernel layout.

    Returns (packed_list, meta). Packed arrays (all full-size, VMEM-resident):
      [W0T (WF,8), b0T (WF,1),
       (WmT (WF,WF), bmT (WF,1)) * n_mid,
       WlT (dpad*(order+2), WF), blT (dpad*(order+2), 1)]
    """
    mlp1, mlp2, ms, ts = params
    order = len(ms) - 1
    half, hidden = mlp1[0][0].shape
    dim = 2 * half
    n_layers = len(mlp1)
    W = (order + 2) * hidden          # per-group fused hidden width
    WF = 2 * W                        # fused width (group A + group B)
    K0 = 8                            # input rows: [xa | xb | t | zero pad]
    dpad = -(-dim // 8) * 8           # sublane-aligned per-block output rows
    f32 = jnp.float32

    # ---- layer 0: input rows -> fused hidden ----------------------------------
    w0 = jnp.zeros((K0, WF), f32)
    b0 = jnp.zeros((1, WF), f32)

    def put_first(w0, b0, col0, w_x, w_t, b, x_row0):
        w0 = w0.at[x_row0:x_row0 + half, col0:col0 + hidden].set(w_x)
        if w_t is not None:
            w0 = w0.at[dim:dim + 1, col0:col0 + hidden].set(w_t)  # t row
        b0 = b0.at[:, col0:col0 + hidden].set(b)
        return w0, b0

    # group A (reads xa = rows 0..half-1): mlp1, then ts[k]
    w0, b0 = put_first(w0, b0, 0, mlp1[0][0], None, mlp1[0][1], 0)
    for k in range(order + 1):
        w0x, w0t, bb = ts[k][0]
        w0, b0 = put_first(w0, b0, (k + 1) * hidden, w0x, w0t, bb, 0)
    # group B (reads xb = rows half..dim-1): mlp2, then ms[k]
    w0, b0 = put_first(w0, b0, W, mlp2[0][0], None, mlp2[0][1], half)
    for k in range(order + 1):
        w0x, w0t, bb = ms[k][0]
        w0, b0 = put_first(w0, b0, W + (k + 1) * hidden, w0x, w0t, bb, half)

    packed = [w0.T.astype(matmul_dtype), b0.T]

    # ---- middle layers: block-diagonal ----------------------------------------
    for l in range(1, n_layers - 1):
        blocks = ([mlp1[l][0]] + [ts[k][l][0] for k in range(order + 1)]
                  + [mlp2[l][0]] + [ms[k][l][0] for k in range(order + 1)])
        biases = ([mlp1[l][1]] + [ts[k][l][1] for k in range(order + 1)]
                  + [mlp2[l][1]] + [ms[k][l][1] for k in range(order + 1)])
        wm = _block_diag(blocks)
        bm = jnp.concatenate(biases, axis=1)
        packed += [wm.T.astype(matmul_dtype), bm.T]

    # ---- last layer: fused hidden -> interleaved output blocks ----------------
    # output row blocks (each padded to dpad rows):
    #   block 0   : [m1 ; m2]
    #   block k+1 : [s_k ; r_k]     (s_k from ms[k], r_k from ts[k])
    OUT = dpad * (order + 2)
    wl = jnp.zeros((WF, OUT), f32)
    bl = jnp.zeros((1, OUT), f32)

    def put_last(wl, bl, hid0, row0, w, b):
        wl = wl.at[hid0:hid0 + hidden, row0:row0 + half].set(w)
        bl = bl.at[:, row0:row0 + half].set(b)
        return wl, bl

    wl, bl = put_last(wl, bl, 0, 0, mlp1[-1][0], mlp1[-1][1])            # m1
    wl, bl = put_last(wl, bl, W, half, mlp2[-1][0], mlp2[-1][1])         # m2
    for k in range(order + 1):
        wl, bl = put_last(wl, bl, W + (k + 1) * hidden,
                          (k + 1) * dpad, ms[k][-1][0], ms[k][-1][1])    # s_k
        wl, bl = put_last(wl, bl, (k + 1) * hidden,
                          (k + 1) * dpad + half, ts[k][-1][0], ts[k][-1][1])  # r_k

    packed += [wl.T.astype(matmul_dtype), bl.T]

    meta = dict(dim=dim, half=half, order=order, hidden=hidden,
                n_mid=n_layers - 2, dpad=dpad, wf=WF, k0=K0)
    return packed, meta


# ------------------------------- kernel ---------------------------------------

def _flownet_kernel(n_mid, dpad, order, x_ref, *rest):
    """Batch-on-lanes forward. x_ref: (8, TB); activations are (width, TB)."""
    w0_ref, b0_ref = rest[0], rest[1]
    mid_refs = rest[2:2 + 2 * n_mid]
    wl_ref, bl_ref = rest[2 + 2 * n_mid], rest[3 + 2 * n_mid]
    out_ref = rest[4 + 2 * n_mid]

    xin = x_ref[...]                                   # (8, TB) f32
    w0 = w0_ref[...]                                   # (WF, 8)
    h = jnp.dot(w0, xin.astype(w0.dtype),
                preferred_element_type=jnp.float32) + b0_ref[...]
    h = jnp.maximum(h, 0.0)                            # (WF, TB)

    for i in range(n_mid):
        wm = mid_refs[2 * i][...]                      # (WF, WF)
        bm = mid_refs[2 * i + 1][...]                  # (WF, 1)
        h = jnp.maximum(
            jnp.dot(wm, h.astype(wm.dtype),
                    preferred_element_type=jnp.float32) + bm, 0.0)

    wl = wl_ref[...]                                   # (dpad*(order+2), WF)
    y = jnp.dot(wl, h.astype(wl.dtype),
                preferred_element_type=jnp.float32) + bl_ref[...]

    # Polynomial combination, vectorized over both halves; k=0 peeled.
    m = y[:dpad, :]                                    # [m1 ; m2]
    out = y[dpad:2 * dpad, :]                          # [s_0 ; r_0]
    p = m
    for k in range(1, order + 1):
        out = out + p * y[(k + 1) * dpad:(k + 2) * dpad, :]
        if k < order:
            p = p * m

    out_ref[...] = out                                 # single unmasked store


# ------------------------------- wrapper ---------------------------------------

def flownet_forward(x, t, packed, meta, *, block_cols=4096):
    """x: (B, dim), t: (B, 1) -> (B, dim). packed/meta from pack_flownet_params."""
    B, dim = x.shape
    assert dim == meta["dim"] and t.shape == (B, 1)
    dpad, k0, wf = meta["dpad"], meta["k0"], meta["wf"]
    order, n_mid = meta["order"], meta["n_mid"]

    # Batch-on-lanes input slab: rows [x^T | t^T | zero pad to 8].
    xt = jnp.zeros((k0, B), jnp.float32)
    xt = xt.at[:dim, :].set(x.T)
    xt = xt.at[dim, :].set(t[:, 0])

    # Lane tiling: tile width multiple of 128; prefer >= 2 grid steps so the
    # "parallel" batch axis can be sharded across v7x's two TensorCores.
    b_pad = -(-B // 128) * 128
    tb = min(block_cols, b_pad)
    tb = -(-tb // 128) * 128
    n_blocks = -(-b_pad // tb)
    if n_blocks == 1 and b_pad >= 256:
        tb = -(-(-(-b_pad // 2)) // 128) * 128
        n_blocks = -(-b_pad // tb)
    b_pad = n_blocks * tb
    if b_pad != B:
        xt = jnp.pad(xt, ((0, 0), (0, b_pad - B)))

    # Lane/sublane-padding-aware VMEM budget. Capped at 48 MiB: safe headroom
    # on v7x's 64 MiB physical VMEM (v5e/v6e have 128 MiB and could go higher).
    def tile_bytes(rows, cols, dtype):
        it = jnp.dtype(dtype).itemsize
        sub = max(8, 32 // it)
        return (-(-rows // sub) * sub) * (-(-cols // 128) * 128) * it

    param_bytes = sum(tile_bytes(p.shape[0], p.shape[1], p.dtype) for p in packed)
    io_bytes = 2 * (tile_bytes(k0, tb, jnp.float32)          # double-buffered x
                    + tile_bytes(dpad, tb, jnp.float32))     # double-buffered out
    act_bytes = (4 * tile_bytes(wf, tb, jnp.float32)                     # h copies
                 + 2 * tile_bytes(dpad * (order + 2), tb, jnp.float32)   # y
                 + 4 * tile_bytes(dpad, tb, jnp.float32))                # poly temps
    vmem_limit = int(min(48 * 1024 * 1024,
                         max(16 * 1024 * 1024,
                             2 * param_bytes + io_bytes + 2 * act_bytes)))

    flops = 2 * b_pad * (k0 * wf + n_mid * wf * wf + wf * dpad * (order + 2))
    bytes_accessed = (xt.size * 4 + dpad * b_pad * 4
                      + sum(int(p.size) * p.dtype.itemsize for p in packed))

    kernel = functools.partial(_flownet_kernel, n_mid, dpad, order)

    out = pl.pallas_call(
        kernel,
        out_shape=jax.ShapeDtypeStruct((dpad, b_pad), jnp.float32),
        grid=(n_blocks,),
        in_specs=[pl.BlockSpec((k0, tb), lambda i: (0, i))]        # x/t slab tile
                 + [pl.BlockSpec(p.shape, lambda i: (0, 0))        # resident weights
                    for p in packed],
        out_specs=pl.BlockSpec((dpad, tb), lambda i: (0, i)),
        compiler_params=pltpu.CompilerParams(
            dimension_semantics=("parallel",),
            vmem_limit_bytes=vmem_limit),
        cost_estimate=pl.CostEstimate(flops=int(flops), transcendentals=0,
                                      bytes_accessed=int(bytes_accessed)),
    )(xt, *packed)

    return out[:dim, :B].T


# -------------------------- parameter construction ----------------------------

def _init_linear(key, fan_in, fan_out):
    kw, kb = jax.random.split(key)
    bound = 1.0 / jnp.sqrt(fan_in)
    w = jax.random.uniform(kw, (fan_in, fan_out), jnp.float32, -bound, bound)
    b = jax.random.uniform(kb, (1, fan_out), jnp.float32, -bound, bound)
    return w, b


def _init_mlp(key, dim, hidden, num_layers):
    sizes = [(dim, hidden)] + [(hidden, hidden)] * (num_layers - 1) + [(hidden, dim)]
    keys = jax.random.split(key, len(sizes))
    return [_init_linear(k, fi, fo) for k, (fi, fo) in zip(keys, sizes)]


def _init_flow_mlp(key, dim, hidden, num_layers):
    # first layer takes dim+1 inputs (x concat t); store its weight split.
    sizes = [(dim + 1, hidden)] + [(hidden, hidden)] * (num_layers - 1) + [(hidden, dim)]
    keys = jax.random.split(key, len(sizes))
    layers = []
    for i, (k, (fi, fo)) in enumerate(zip(keys, sizes)):
        w, b = _init_linear(k, fi, fo)
        if i == 0:
            layers.append((w[:dim, :], w[dim:dim + 1, :], b))  # (W0x, W0t, b0)
        else:
            layers.append((w, b))
    return layers


def init_poly_mlp_nvp_params(key, dim, hidden_dim_s, hidden_layer_number, order):
    half = dim // 2
    k1, k2, k3, k4 = jax.random.split(key, 4)
    mlp1 = _init_mlp(k1, half, hidden_dim_s, hidden_layer_number)
    mlp2 = _init_mlp(k2, half, hidden_dim_s, hidden_layer_number)
    ms = [_init_flow_mlp(k, half, hidden_dim_s, hidden_layer_number)
          for k in jax.random.split(k3, order + 1)]
    ts = [_init_flow_mlp(k, half, hidden_dim_s, hidden_layer_number)
          for k in jax.random.split(k4, order + 1)]
    return (mlp1, mlp2, ms, ts)


# --------------------------------- main ----------------------------------------

if __name__ == "__main__":
    # Module hyper-params (small, consistent with the PyTorch __init__).
    dim = 4                    # flow dimension (split into two halves of 2)
    hidden_dim_s = 32
    hidden_layer_number = 2
    order = 2
    batch = 8

    key = jax.random.PRNGKey(0)
    kx, kt, kp = jax.random.split(key, 3)

    x = jax.random.normal(kx, (batch, dim), dtype=jnp.float32)
    t = jax.random.uniform(kt, (batch, 1), dtype=jnp.float32)
    params = init_poly_mlp_nvp_params(kp, dim, hidden_dim_s,
                                      hidden_layer_number, order)

    # Pack once: all 2*(order+2) tiny MLPs fused into one 256-wide transposed
    # stack. (Use matmul_dtype=jnp.bfloat16 on v6e/v7x for bf16 MXU weights
    # with f32 accumulation; f32 here keeps the 1e-5 numerical check tight.)
    packed, meta = pack_flownet_params(params, matmul_dtype=jnp.float32)

    out = flownet_forward(x, t, packed, meta)
    out = jax.block_until_ready(out)

    ref = poly_mlp_nvp_reference(x, t, params, order)
    assert out.shape == (batch, dim)
    err = float(jnp.max(jnp.abs(out - ref)))
    assert jnp.allclose(out, ref, atol=1e-5, rtol=1e-5), f"mismatch: max err {err}"

    print("KERNEL_OK")
</pallas_src>

<mosaic_0001>
module attributes {stable_mosaic.version = 11 : i64} {
  func.func @_flownet_kernel(%arg0: i32, %arg1: memref<8x128xf32, #tpu.memory_space<vmem>>, %arg2: memref<256x8xf32, #tpu.memory_space<vmem>>, %arg3: memref<256x1xf32, #tpu.memory_space<vmem>>, %arg4: memref<256x256xf32, #tpu.memory_space<vmem>>, %arg5: memref<256x1xf32, #tpu.memory_space<vmem>>, %arg6: memref<32x256xf32, #tpu.memory_space<vmem>>, %arg7: memref<32x1xf32, #tpu.memory_space<vmem>>, %arg8: memref<8x128xf32, #tpu.memory_space<vmem>>) attributes {dimension_semantics = [#tpu.dimension_semantics<parallel>], iteration_bounds = array<i64: 1>, scalar_prefetch = 0 : i64, scratch_operands = 0 : i64, tpu.core_type = #tpu.core_type<tc>, window_params = [{transform_indices = @transform_0, window_bounds = array<i64: 8, 128>}, {pipeline_mode = #tpu.pipeline_mode<synchronous>, transform_indices = @transform_1, window_bounds = array<i64: 256, 8>}, {pipeline_mode = #tpu.pipeline_mode<synchronous>, transform_indices = @transform_2, window_bounds = array<i64: 256, 1>}, {pipeline_mode = #tpu.pipeline_mode<synchronous>, transform_indices = @transform_3, window_bounds = array<i64: 256, 256>}, {pipeline_mode = #tpu.pipeline_mode<synchronous>, transform_indices = @transform_4, window_bounds = array<i64: 256, 1>}, {pipeline_mode = #tpu.pipeline_mode<synchronous>, transform_indices = @transform_5, window_bounds = array<i64: 32, 256>}, {pipeline_mode = #tpu.pipeline_mode<synchronous>, transform_indices = @transform_6, window_bounds = array<i64: 32, 1>}, {transform_indices = @transform_7, window_bounds = array<i64: 8, 128>}]} {
    %c0 = arith.constant 0 : index
    %c0_0 = arith.constant 0 : index
    %0 = vector.load %arg1[%c0, %c0_0] : memref<8x128xf32, #tpu.memory_space<vmem>>, vector<8x128xf32>
    %c0_1 = arith.constant 0 : index
    %c0_2 = arith.constant 0 : index
    %1 = vector.load %arg2[%c0_1, %c0_2] : memref<256x8xf32, #tpu.memory_space<vmem>>, vector<256x8xf32>
    %cst = arith.constant dense<0.000000e+00> : vector<256x128xf32>
    %2 = tpu.matmul %1, %0, %cst {dimension_numbers = #tpu.dot_dimension_numbers<[1], [0], [0], [1], [0, 0, 1, 1], [], []>} : vector<256x8xf32>, vector<8x128xf32>, vector<256x128xf32> -> vector<256x128xf32>
    %c0_3 = arith.constant 0 : index
    %c0_4 = arith.constant 0 : index
    %3 = vector.load %arg3[%c0_3, %c0_4] : memref<256x1xf32, #tpu.memory_space<vmem>>, vector<256x1xf32>
    %4 = vector.broadcast %3 : vector<256x1xf32> to vector<256x128xf32>
    %5 = arith.addf %2, %4 : vector<256x128xf32>
    %cst_5 = arith.constant 0.000000e+00 : f32
    %6 = vector.broadcast %cst_5 : f32 to vector<256x128xf32>
    %7 = arith.maximumf %5, %6 : vector<256x128xf32>
    %c0_6 = arith.constant 0 : index
    %c0_7 = arith.constant 0 : index
    %8 = vector.load %arg4[%c0_6, %c0_7] : memref<256x256xf32, #tpu.memory_space<vmem>>, vector<256x256xf32>
    %c0_8 = arith.constant 0 : index
    %c0_9 = arith.constant 0 : index
    %9 = vector.load %arg5[%c0_8, %c0_9] : memref<256x1xf32, #tpu.memory_space<vmem>>, vector<256x1xf32>
    %cst_10 = arith.constant dense<0.000000e+00> : vector<256x128xf32>
    %10 = tpu.matmul %8, %7, %cst_10 {dimension_numbers = #tpu.dot_dimension_numbers<[1], [0], [0], [1], [0, 0, 1, 1], [], []>} : vector<256x256xf32>, vector<256x128xf32>, vector<256x128xf32> -> vector<256x128xf32>
    %11 = vector.broadcast %9 : vector<256x1xf32> to vector<256x128xf32>
    %12 = arith.addf %10, %11 : vector<256x128xf32>
    %cst_11 = arith.constant 0.000000e+00 : f32
    %13 = vector.broadcast %cst_11 : f32 to vector<256x128xf32>
    %14 = arith.maximumf %12, %13 : vector<256x128xf32>
    %c0_12 = arith.constant 0 : index
    %c0_13 = arith.constant 0 : index
    %15 = vector.load %arg6[%c0_12, %c0_13] : memref<32x256xf32, #tpu.memory_space<vmem>>, vector<32x256xf32>
    %cst_14 = arith.constant dense<0.000000e+00> : vector<32x128xf32>
    %16 = tpu.matmul %15, %14, %cst_14 {dimension_numbers = #tpu.dot_dimension_numbers<[1], [0], [0], [1], [0, 0, 1, 1], [], []>} : vector<32x256xf32>, vector<256x128xf32>, vector<32x128xf32> -> vector<32x128xf32>
    %c0_15 = arith.constant 0 : index
    %c0_16 = arith.constant 0 : index
    %17 = vector.load %arg7[%c0_15, %c0_16] : memref<32x1xf32, #tpu.memory_space<vmem>>, vector<32x1xf32>
    %18 = vector.broadcast %17 : vector<32x1xf32> to vector<32x128xf32>
    %19 = arith.addf %16, %18 : vector<32x128xf32>
    %20 = vector.extract_strided_slice %19 {offsets = [0, 0], sizes = [8, 128], strides = [1, 1]} : vector<32x128xf32> to vector<8x128xf32>
    %21 = vector.extract_strided_slice %19 {offsets = [8, 0], sizes = [8, 128], strides = [1, 1]} : vector<32x128xf32> to vector<8x128xf32>
    %22 = vector.extract_strided_slice %19 {offsets = [16, 0], sizes = [8, 128], strides = [1, 1]} : vector<32x128xf32> to vector<8x128xf32>
    %23 = arith.mulf %20, %22 : vector<8x128xf32>
    %24 = arith.addf %21, %23 : vector<8x128xf32>
    %25 = arith.mulf %20, %20 : vector<8x128xf32>
    %26 = vector.extract_strided_slice %19 {offsets = [24, 0], sizes = [8, 128], strides = [1, 1]} : vector<32x128xf32> to vector<8x128xf32>
    %27 = arith.mulf %25, %26 : vector<8x128xf32>
    %28 = arith.addf %24, %27 : vector<8x128xf32>
    %c0_17 = arith.constant 0 : index
    %c0_18 = arith.constant 0 : index
    %29 = vector.load %arg8[%c0_17, %c0_18] : memref<8x128xf32, #tpu.memory_space<vmem>>, vector<8x128xf32>
    tpu.vector_store %arg8[%c0_17, %c0_18], %28 {strides = array<i32>} : memref<8x128xf32, #tpu.memory_space<vmem>>, vector<8x128xf32>,
    return
  }
  func.func @transform_0(%arg0: i32) -> (i32, i32) {
    %c0_i32 = arith.constant 0 : i32
    %c0_i32_0 = arith.constant 0 : i32
    return %c0_i32, %arg0 : i32, i32
  }
  func.func @transform_1(%arg0: i32) -> (i32, i32) {
    %c0_i32 = arith.constant 0 : i32
    %c0_i32_0 = arith.constant 0 : i32
    %c0_i32_1 = arith.constant 0 : i32
    return %c0_i32, %c0_i32_0 : i32, i32
  }
  func.func @transform_2(%arg0: i32) -> (i32, i32) {
    %c0_i32 = arith.constant 0 : i32
    %c0_i32_0 = arith.constant 0 : i32
    %c0_i32_1 = arith.constant 0 : i32
    return %c0_i32, %c0_i32_0 : i32, i32
  }
  func.func @transform_3(%arg0: i32) -> (i32, i32) {
    %c0_i32 = arith.constant 0 : i32
    %c0_i32_0 = arith.constant 0 : i32
    %c0_i32_1 = arith.constant 0 : i32
    return %c0_i32, %c0_i32_0 : i32, i32
  }
  func.func @transform_4(%arg0: i32) -> (i32, i32) {
    %c0_i32 = arith.constant 0 : i32
    %c0_i32_0 = arith.constant 0 : i32
    %c0_i32_1 = arith.constant 0 : i32
    return %c0_i32, %c0_i32_0 : i32, i32
  }
  func.func @transform_5(%arg0: i32) -> (i32, i32) {
    %c0_i32 = arith.constant 0 : i32
    %c0_i32_0 = arith.constant 0 : i32
    %c0_i32_1 = arith.constant 0 : i32
    return %c0_i32, %c0_i32_0 : i32, i32
  }
  func.func @transform_6(%arg0: i32) -> (i32, i32) {
    %c0_i32 = arith.constant 0 : i32
    %c0_i32_0 = arith.constant 0 : i32
    %c0_i32_1 = arith.constant 0 : i32
    return %c0_i32, %c0_i32_0 : i32, i32
  }
  func.func @transform_7(%arg0: i32) -> (i32, i32) {
    %c0_i32 = arith.constant 0 : i32
    %c0_i32_0 = arith.constant 0 : i32
    return %c0_i32, %arg0 : i32, i32
  }
}

</mosaic_0001>

<llo_original>
// kernel: tpu_custom_call.1
$region0: #{tpu_custom_call.1}
  #allocation0 [shape = 'u32[]', space=smem, size = 0x4, offset = 0x4, fixed_abs, tag = 'smem constant byte address 0x4 - core index']
  #allocation1 [shape = 'u32[72,128]{1,0:T(1,128)}', space=vmem, size = 0x9000, scoped, tag = 'internal scratch']
  %s0 = inlined_call_operand.vmem [shape: f32[8,128], index: 0, kind: input, shape index: {}]
  %s1 = inlined_call_operand.vmem [shape: f32[256,8], index: 1, kind: input, shape index: {}]
  %s2 = inlined_call_operand.vmem [shape: f32[256,1], index: 2, kind: input, shape index: {}]
  %s3 = inlined_call_operand.vmem [shape: f32[256,256], index: 3, kind: input, shape index: {}]
  %s4 = inlined_call_operand.vmem [shape: f32[256,1], index: 4, kind: input, shape index: {}]
  %s5 = inlined_call_operand.vmem [shape: f32[32,256], index: 5, kind: input, shape index: {}]
  %s6 = inlined_call_operand.vmem [shape: f32[32,1], index: 6, kind: input, shape index: {}]
  %s7 = inlined_call_operand.hbm [shape: f32[8,128], index: 7, kind: output, shape index: {}]
  %s8 = sld [smem:[#allocation0]]
  $region38: #{tpu_custom_call.1} parent=0
    _
  %s10 = ssub.s32 1, %s8
  %s11 = scalar_select 0, %s10, %s8
  $region1: #{tpu_custom_call.1} parent=0
    #allocation2 [shape = 'u8[4096]{0}', space=vmem, size = 0x1000, scoped, tag = 'output window, operand 0, single buffered']
    #allocation3 [shape = 's32[1]{0}', space=sflag, size = 0x4, scoped, tag = 'scoped memory for tpu_custom_call.1']
    %12 = vsyncpa [#allocation3], 0
    // Predicated region
    $region2: #{tpu_custom_call.1} parent=1 // pred_check
      _
    $region3: #{tpu_custom_call.1} parent=1 // pred_check_branch
      %14 = sbr.rel (0) target = $region5
    $region4: #{tpu_custom_call.1} parent=1 // pred_region
      _
    $region5: #{tpu_custom_call.1} parent=1 // pred_fallthru
      _
    // Predicated region
    $region6: #{tpu_custom_call.1} parent=1 // pred_check
      _
    $region7: #{tpu_custom_call.1} parent=1 // pred_check_branch
      %16 = sbr.rel (0) target = $region9
    $region8: #{tpu_custom_call.1} parent=1 // pred_region
      _
    $region9: #{tpu_custom_call.1} parent=1 // pred_fallthru
      _
    // Predicated region
    $region10: #{tpu_custom_call.1} parent=1 // pred_check
      _
    $region11: #{tpu_custom_call.1} parent=1 // pred_check_branch
      %18 = sbr.rel (0) target = $region13
    $region12: #{tpu_custom_call.1} parent=1 // pred_region
      _
    $region13: #{tpu_custom_call.1} parent=1 // pred_fallthru
      _
    // Predicated region
    $region14: #{tpu_custom_call.1} parent=1 // pred_check
      _
    $region15: #{tpu_custom_call.1} parent=1 // pred_check_branch
      %20 = sbr.rel (0) target = $region17
    $region16: #{tpu_custom_call.1} parent=1 // pred_region
      _
    $region17: #{tpu_custom_call.1} parent=1 // pred_fallthru
      _
    // Predicated region
    $region18: #{tpu_custom_call.1} parent=1 // pred_check
      _
    $region19: #{tpu_custom_call.1} parent=1 // pred_check_branch
      %22 = sbr.rel (0) target = $region21
    $region20: #{tpu_custom_call.1} parent=1 // pred_region
      _
    $region21: #{tpu_custom_call.1} parent=1 // pred_fallthru
      _
    // Predicated region
    $region22: #{tpu_custom_call.1} parent=1 // pred_check
      _
    $region23: #{tpu_custom_call.1} parent=1 // pred_check_branch
      %24 = sbr.rel (0) target = $region25
    $region24: #{tpu_custom_call.1} parent=1 // pred_region
      _
    $region25: #{tpu_custom_call.1} parent=1 // pred_fallthru
      _
    // Predicated region
    $region26: #{tpu_custom_call.1} parent=1 // pred_check
      _
    $region27: #{tpu_custom_call.1} parent=1 // pred_check_branch
      %26 = sbr.rel (0) target = $region29
    $region28: #{tpu_custom_call.1} parent=1 // pred_region
      _
    $region29: #{tpu_custom_call.1} parent=1 // pred_fallthru
      _
    %v27 = vld [vmem:[%s0] sm:$0xff]
    %v28 = vld [vmem:[%s1] sm:$0xff]
    %v29 = vld [vmem:[%s1 + $0x8] sm:$0xff]
    %v30 = vld [vmem:[%s1 + $0x10] sm:$0xff]
    %v31 = vld [vmem:[%s1 + $0x18] sm:$0xff]
    %v32 = vld [vmem:[%s1 + $0x20] sm:$0xff]
    %v33 = vld [vmem:[%s1 + $0x28] sm:$0xff]
    %v34 = vld [vmem:[%s1 + $0x30] sm:$0xff]
    %v35 = vld [vmem:[%s1 + $0x38] sm:$0xff]
    %v36 = vld [vmem:[%s1 + $0x40] sm:$0xff]
    %v37 = vld [vmem:[%s1 + $0x48] sm:$0xff]
    %v38 = vld [vmem:[%s1 + $0x50] sm:$0xff]
    %v39 = vld [vmem:[%s1 + $0x58] sm:$0xff]
    %v40 = vld [vmem:[%s1 + $0x60] sm:$0xff]
    %v41 = vld [vmem:[%s1 + $0x68] sm:$0xff]
    %v42 = vld [vmem:[%s1 + $0x70] sm:$0xff]
    %v43 = vld [vmem:[%s1 + $0x78] sm:$0xff]
    %v44 = vld [vmem:[%s1 + $0x80] sm:$0xff]
    %v45 = vld [vmem:[%s1 + $0x88] sm:$0xff]
    %v46 = vld [vmem:[%s1 + $0x90] sm:$0xff]
    %v47 = vld [vmem:[%s1 + $0x98] sm:$0xff]
    %v48 = vld [vmem:[%s1 + $0xa0] sm:$0xff]
    %v49 = vld [vmem:[%s1 + $0xa8] sm:$0xff]
    %v50 = vld [vmem:[%s1 + $0xb0] sm:$0xff]
    %v51 = vld [vmem:[%s1 + $0xb8] sm:$0xff]
    %v52 = vld [vmem:[%s1 + $0xc0] sm:$0xff]
    %v53 = vld [vmem:[%s1 + $0xc8] sm:$0xff]
    %v54 = vld [vmem:[%s1 + $0xd0] sm:$0xff]
    %v55 = vld [vmem:[%s1 + $0xd8] sm:$0xff]
    %v56 = vld [vmem:[%s1 + $0xe0] sm:$0xff]
    %v57 = vld [vmem:[%s1 + $0xe8] sm:$0xff]
    %v58 = vld [vmem:[%s1 + $0xf0] sm:$0xff]
    %v59 = vld [vmem:[%s1 + $0xf8] sm:$0xff]
    %v60 = vld [vmem:[%s2] sm:$0xff]
    %v61 = vld [vmem:[%s2 + $0x8] sm:$0xff]
    %v62 = vld [vmem:[%s2 + $0x10] sm:$0xff]
    %v63 = vld [vmem:[%s2 + $0x18] sm:$0xff]
    %v64 = vld [vmem:[%s2 + $0x20] sm:$0xff]
    %v65 = vld [vmem:[%s2 + $0x28] sm:$0xff]
    %v66 = vld [vmem:[%s2 + $0x30] sm:$0xff]
    %v67 = vld [vmem:[%s2 + $0x38] sm:$0xff]
    %v68 = vld [vmem:[%s2 + $0x40] sm:$0xff]
    %v69 = vld [vmem:[%s2 + $0x48] sm:$0xff]
    %v70 = vld [vmem:[%s2 + $0x50] sm:$0xff]
    %v71 = vld [vmem:[%s2 + $0x58] sm:$0xff]
    %v72 = vld [vmem:[%s2 + $0x60] sm:$0xff]
    %v73 = vld [vmem:[%s2 + $0x68] sm:$0xff]
    %v74 = vld [vmem:[%s2 + $0x70] sm:$0xff]
    %v75 = vld [vmem:[%s2 + $0x78] sm:$0xff]
    %v76 = vld [vmem:[%s2 + $0x80] sm:$0xff]
    %v77 = vld [vmem:[%s2 + $0x88] sm:$0xff]
    %v78 = vld [vmem:[%s2 + $0x90] sm:$0xff]
    %v79 = vld [vmem:[%s2 + $0x98] sm:$0xff]
    %v80 = vld [vmem:[%s2 + $0xa0] sm:$0xff]
    %v81 = vld [vmem:[%s2 + $0xa8] sm:$0xff]
    %v82 = vld [vmem:[%s2 + $0xb0] sm:$0xff]
    %v83 = vld [vmem:[%s2 + $0xb8] sm:$0xff]
    %v84 = vld [vmem:[%s2 + $0xc0] sm:$0xff]
    %v85 = vld [vmem:[%s2 + $0xc8] sm:$0xff]
    %v86 = vld [vmem:[%s2 + $0xd0] sm:$0xff]
    %v87 = vld [vmem:[%s2 + $0xd8] sm:$0xff]
    %v88 = vld [vmem:[%s2 + $0xe0] sm:$0xff]
    %v89 = vld [vmem:[%s2 + $0xe8] sm:$0xff]
    %v90 = vld [vmem:[%s2 + $0xf0] sm:$0xff]
    %v91 = vld [vmem:[%s2 + $0xf8] sm:$0xff]
    %93 = vset.pattern.permute.xlu0 0
    %94 = vperm.xlu0 %93, %v60
    %v95 = vpop.permute.xlu0 %94
    %98 = vset.pattern.permute.xlu0 0
    %99 = vperm.xlu0 %98, %v61
    %v100 = vpop.permute.xlu0 %99
    %103 = vset.pattern.permute.xlu0 0
    %104 = vperm.xlu0 %103, %v62
    %v105 = vpop.permute.xlu0 %104
    %108 = vset.pattern.permute.xlu0 0
    %109 = vperm.xlu0 %108, %v63
    %v110 = vpop.permute.xlu0 %109
    %113 = vset.pattern.permute.xlu0 0
    %114 = vperm.xlu0 %113, %v64
    %v115 = vpop.permute.xlu0 %114
    %118 = vset.pattern.permute.xlu0 0
    %119 = vperm.xlu0 %118, %v65
    %v120 = vpop.permute.xlu0 %119
    %123 = vset.pattern.permute.xlu0 0
    %124 = vperm.xlu0 %123, %v66
    %v125 = vpop.permute.xlu0 %124
    %128 = vset.pattern.permute.xlu0 0
    %129 = vperm.xlu0 %128, %v67
    %v130 = vpop.permute.xlu0 %129
    %133 = vset.pattern.permute.xlu0 0
    %134 = vperm.xlu0 %133, %v68
    %v135 = vpop.permute.xlu0 %134
    %138 = vset.pattern.permute.xlu0 0
    %139 = vperm.xlu0 %138, %v69
    %v140 = vpop.permute.xlu0 %139
    %143 = vset.pattern.permute.xlu0 0
    %144 = vperm.xlu0 %143, %v70
    %v145 = vpop.permute.xlu0 %144
    %148 = vset.pattern.permute.xlu0 0
    %149 = vperm.xlu0 %148, %v71
    %v150 = vpop.permute.xlu0 %149
    %153 = vset.pattern.permute.xlu0 0
    %154 = vperm.xlu0 %153, %v72
    %v155 = vpop.permute.xlu0 %154
    %158 = vset.pattern.permute.xlu0 0
    %159 = vperm.xlu0 %158, %v73
    %v160 = vpop.permute.xlu0 %159
    %163 = vset.pattern.permute.xlu0 0
    %164 = vperm.xlu0 %163, %v74
    %v165 = vpop.permute.xlu0 %164
    %168 = vset.pattern.permute.xlu0 0
    %169 = vperm.xlu0 %168, %v75
    %v170 = vpop.permute.xlu0 %169
    %173 = vset.pattern.permute.xlu0 0
    %174 = vperm.xlu0 %173, %v76
    %v175 = vpop.permute.xlu0 %174
    %178 = vset.pattern.permute.xlu0 0
    %179 = vperm.xlu0 %178, %v77
    %v180 = vpop.permute.xlu0 %179
    %183 = vset.pattern.permute.xlu0 0
    %184 = vperm.xlu0 %183, %v78
    %v185 = vpop.permute.xlu0 %184
    %188 = vset.pattern.permute.xlu0 0
    %189 = vperm.xlu0 %188, %v79
    %v190 = vpop.permute.xlu0 %189
    %193 = vset.pattern.permute.xlu0 0
    %194 = vperm.xlu0 %193, %v80
    %v195 = vpop.permute.xlu0 %194
    %198 = vset.pattern.permute.xlu0 0
    %199 = vperm.xlu0 %198, %v81
    %v200 = vpop.permute.xlu0 %199
    %203 = vset.pattern.permute.xlu0 0
    %204 = vperm.xlu0 %203, %v82
    %v205 = vpop.permute.xlu0 %204
    %208 = vset.pattern.permute.xlu0 0
    %209 = vperm.xlu0 %208, %v83
    %v210 = vpop.permute.xlu0 %209
    %213 = vset.pattern.permute.xlu0 0
    %214 = vperm.xlu0 %213, %v84
    %v215 = vpop.permute.xlu0 %214
    %218 = vset.pattern.permute.xlu0 0
    %219 = vperm.xlu0 %218, %v85
    %v220 = vpop.permute.xlu0 %219
    %223 = vset.pattern.permute.xlu0 0
    %224 = vperm.xlu0 %223, %v86
    %v225 = vpop.permute.xlu0 %224
    %228 = vset.pattern.permute.xlu0 0
    %229 = vperm.xlu0 %228, %v87
    %v230 = vpop.permute.xlu0 %229
    %233 = vset.pattern.permute.xlu0 0
    %234 = vperm.xlu0 %233, %v88
    %v235 = vpop.permute.xlu0 %234
    %238 = vset.pattern.permute.xlu0 0
    %239 = vperm.xlu0 %238, %v89
    %v240 = vpop.permute.xlu0 %239
    %243 = vset.pattern.permute.xlu0 0
    %244 = vperm.xlu0 %243, %v90
    %v245 = vpop.permute.xlu0 %244
    %248 = vset.pattern.permute.xlu0 0
    %249 = vperm.xlu0 %248, %v91
    %v250 = vpop.permute.xlu0 %249
    %vm252 = vcmask 64512
    %v254 = vsel %vm252, %v28, 0
    %v257 = vsel %vm252, %v29, 0
    %v260 = vsel %vm252, %v30, 0
    %v263 = vsel %vm252, %v31, 0
    %v266 = vsel %vm252, %v32, 0
    %v269 = vsel %vm252, %v33, 0
    %v272 = vsel %vm252, %v34, 0
    %v275 = vsel %vm252, %v35, 0
    %v278 = vsel %vm252, %v36, 0
    %v281 = vsel %vm252, %v37, 0
    %v284 = vsel %vm252, %v38, 0
    %v287 = vsel %vm252, %v39, 0
    %v290 = vsel %vm252, %v40, 0
    %v293 = vsel %vm252, %v41, 0
    %v296 = vsel %vm252, %v42, 0
    %v299 = vsel %vm252, %v43, 0
    %v302 = vsel %vm252, %v44, 0
    %v305 = vsel %vm252, %v45, 0
    %v308 = vsel %vm252, %v46, 0
    %v311 = vsel %vm252, %v47, 0
    %v314 = vsel %vm252, %v48, 0
    %v317 = vsel %vm252, %v49, 0
    %v320 = vsel %vm252, %v50, 0
    %v323 = vsel %vm252, %v51, 0
    %v326 = vsel %vm252, %v52, 0
    %v329 = vsel %vm252, %v53, 0
    %v332 = vsel %vm252, %v54, 0
    %v335 = vsel %vm252, %v55, 0
    %v338 = vsel %vm252, %v56, 0
    %v341 = vsel %vm252, %v57, 0
    %v344 = vsel %vm252, %v58, 0
    %v347 = vsel %vm252, %v59, 0
    %349 = vmatpush.msra.mxu0 0.0
    %350 = vmatpush.msra.mxu0 0.0
    %351 = vmatpush.msra.mxu0 0.0
    %352 = vmatpush.msra.mxu0 0.0
    %353 = vmatpush.msra.mxu0 0.0
    %354 = vmatpush.msra.mxu0 0.0
    %355 = vmatpush.msra.mxu0 0.0
    %356 = vmatpush.msra.mxu0 0.0
    %357 = vmatpush.msra.mxu0 0.0
    %358 = vmatpush.msra.mxu0 0.0
    %359 = vmatpush.msra.mxu0 0.0
    %360 = vmatpush.msra.mxu0 0.0
    %361 = vmatpush.msra.mxu0 0.0
    %362 = vmatpush.msra.mxu0 0.0
    %363 = vmatpush.msra.mxu0 0.0
    %364 = vmatpush.msra.mxu0 %v27
    %365 = vmatmul.f32.gmra.mxu0 %v254
    %v366 = vpop.f32.mrf.mxu0
    %v367 = vadd.f32 %v95, %v366
    %368 = vmatmul.f32.gmra.mxu0 %v257
    %v369 = vpop.f32.mrf.mxu0
    %v370 = vadd.f32 %v100, %v369
    %371 = vmatmul.f32.gmra.mxu0 %v260
    %v372 = vpop.f32.mrf.mxu0
    %v373 = vadd.f32 %v105, %v372
    %374 = vmatmul.f32.gmra.mxu0 %v263
    %v375 = vpop.f32.mrf.mxu0
    %v376 = vadd.f32 %v110, %v375
    %377 = vmatmul.f32.gmra.mxu0 %v266
    %v378 = vpop.f32.mrf.mxu0
    %v379 = vadd.f32 %v115, %v378
    %380 = vmatmul.f32.gmra.mxu0 %v269
    %v381 = vpop.f32.mrf.mxu0
    %v382 = vadd.f32 %v120, %v381
    %383 = vmatmul.f32.gmra.mxu0 %v272
    %v384 = vpop.f32.mrf.mxu0
    %v385 = vadd.f32 %v125, %v384
    %386 = vmatmul.f32.gmra.mxu0 %v275
    %v387 = vpop.f32.mrf.mxu0
    %v388 = vadd.f32 %v130, %v387
    %389 = vmatmul.f32.gmra.mxu0 %v278
    %v390 = vpop.f32.mrf.mxu0
    %v391 = vadd.f32 %v135, %v390
    %392 = vmatmul.f32.gmra.mxu0 %v281
    %v393 = vpop.f32.mrf.mxu0
    %v394 = vadd.f32 %v140, %v393
    %395 = vmatmul.f32.gmra.mxu0 %v284
    %v396 = vpop.f32.mrf.mxu0
    %v397 = vadd.f32 %v145, %v396
    %398 = vmatmul.f32.gmra.mxu0 %v287
    %v399 = vpop.f32.mrf.mxu0
    %v400 = vadd.f32 %v150, %v399
    %401 = vmatmul.f32.gmra.mxu0 %v290
    %v402 = vpop.f32.mrf.mxu0
    %v403 = vadd.f32 %v155, %v402
    %404 = vmatmul.f32.gmra.mxu0 %v293
    %v405 = vpop.f32.mrf.mxu0
    %v406 = vadd.f32 %v160, %v405
    %407 = vmatmul.f32.gmra.mxu0 %v296
    %v408 = vpop.f32.mrf.mxu0
    %v409 = vadd.f32 %v165, %v408
    %410 = vmatmul.f32.gmra.mxu0 %v299
    %v411 = vpop.f32.mrf.mxu0
    %v412 = vadd.f32 %v170, %v411
    %413 = vmatmul.f32.gmra.mxu0 %v302
    %v414 = vpop.f32.mrf.mxu0
    %v415 = vadd.f32 %v175, %v414
    %416 = vmatmul.f32.gmra.mxu0 %v305
    %v417 = vpop.f32.mrf.mxu0
    %v418 = vadd.f32 %v180, %v417
    %419 = vmatmul.f32.gmra.mxu0 %v308
    %v420 = vpop.f32.mrf.mxu0
    %v421 = vadd.f32 %v185, %v420
    %422 = vmatmul.f32.gmra.mxu0 %v311
    %v423 = vpop.f32.mrf.mxu0
    %v424 = vadd.f32 %v190, %v423
    %425 = vmatmul.f32.gmra.mxu0 %v314
    %v426 = vpop.f32.mrf.mxu0
    %v427 = vadd.f32 %v195, %v426
    %428 = vmatmul.f32.gmra.mxu0 %v317
    %v429 = vpop.f32.mrf.mxu0
    %v430 = vadd.f32 %v200, %v429
    %431 = vmatmul.f32.gmra.mxu0 %v320
    %v432 = vpop.f32.mrf.mxu0
    %v433 = vadd.f32 %v205, %v432
    %434 = vmatmul.f32.gmra.mxu0 %v323
    %v435 = vpop.f32.mrf.mxu0
    %v436 = vadd.f32 %v210, %v435
    %437 = vmatmul.f32.gmra.mxu0 %v326
    %v438 = vpop.f32.mrf.mxu0
    %v439 = vadd.f32 %v215, %v438
    %440 = vmatmul.f32.gmra.mxu0 %v329
    %v441 = vpop.f32.mrf.mxu0
    %v442 = vadd.f32 %v220, %v441
    %443 = vmatmul.f32.gmra.mxu0 %v332
    %v444 = vpop.f32.mrf.mxu0
    %v445 = vadd.f32 %v225, %v444
    %446 = vmatmul.f32.gmra.mxu0 %v335
    %v447 = vpop.f32.mrf.mxu0
    %v448 = vadd.f32 %v230, %v447
    %449 = vmatmul.f32.gmra.mxu0 %v338
    %v450 = vpop.f32.mrf.mxu0
    %v451 = vadd.f32 %v235, %v450
    %452 = vmatmul.f32.gmra.mxu0 %v341
    %v453 = vpop.f32.mrf.mxu0
    %v454 = vadd.f32 %v240, %v453
    %455 = vmatmul.f32.gmra.mxu0 %v344
    %v456 = vpop.f32.mrf.mxu0
    %v457 = vadd.f32 %v245, %v456
    %458 = vmatmul.f32.gmra.mxu0 %v347
    %v459 = vpop.f32.mrf.mxu0
    %v460 = vadd.f32 %v250, %v459
    %461 = vdwg.mxu0
    %v462 = vmax.f32 %v367, 0.0
    %v463 = vmax.f32 %v370, 0.0
    %v464 = vmax.f32 %v373, 0.0
    %v465 = vmax.f32 %v376, 0.0
    %v466 = vmax.f32 %v379, 0.0
    %v467 = vmax.f32 %v382, 0.0
    %v468 = vmax.f32 %v385, 0.0
    %v469 = vmax.f32 %v388, 0.0
    %v470 = vmax.f32 %v391, 0.0
    %v471 = vmax.f32 %v394, 0.0
    %v472 = vmax.f32 %v397, 0.0
    %v473 = vmax.f32 %v400, 0.0
    %v474 = vmax.f32 %v403, 0.0
    %v475 = vmax.f32 %v406, 0.0
    %v476 = vmax.f32 %v409, 0.0
    %v477 = vmax.f32 %v412, 0.0
    %v478 = vmax.f32 %v415, 0.0
    %v479 = vmax.f32 %v418, 0.0
    %v480 = vmax.f32 %v421, 0.0
    %v481 = vmax.f32 %v424, 0.0
    %v482 = vmax.f32 %v427, 0.0
    %v483 = vmax.f32 %v430, 0.0
    %v484 = vmax.f32 %v433, 0.0
    %v485 = vmax.f32 %v436, 0.0
    %v486 = vmax.f32 %v439, 0.0
    %v487 = vmax.f32 %v442, 0.0
    %v488 = vmax.f32 %v445, 0.0
    %v489 = vmax.f32 %v448, 0.0
    %v490 = vmax.f32 %v451, 0.0
    %v491 = vmax.f32 %v454, 0.0
    %v492 = vmax.f32 %v457, 0.0
    %v493 = vmax.f32 %v460, 0.0
    %v494 = vld [vmem:[%s3] sm:$0xff]
    %v495 = vld [vmem:[%s3 + $0x8] sm:$0xff]
    %v496 = vld [vmem:[%s3 + $0x10] sm:$0xff]
    %v497 = vld [vmem:[%s3 + $0x18] sm:$0xff]
    %v498 = vld [vmem:[%s3 + $0x20] sm:$0xff]
    %v499 = vld [vmem:[%s3 + $0x28] sm:$0xff]
    %v500 = vld [vmem:[%s3 + $0x30] sm:$0xff]
    %v501 = vld [vmem:[%s3 + $0x38] sm:$0xff]
    %v502 = vld [vmem:[%s3 + $0x40] sm:$0xff]
    %v503 = vld [vmem:[%s3 + $0x48] sm:$0xff]
    %v504 = vld [vmem:[%s3 + $0x50] sm:$0xff]
    %v505 = vld [vmem:[%s3 + $0x58] sm:$0xff]
    %v506 = vld [vmem:[%s3 + $0x60] sm:$0xff]
    %v507 = vld [vmem:[%s3 + $0x68] sm:$0xff]
    %v508 = vld [vmem:[%s3 + $0x70] sm:$0xff]
    %v509 = vld [vmem:[%s3 + $0x78] sm:$0xff]
    %v510 = vld [vmem:[%s3 + $0x80] sm:$0xff]
    %v511 = vld [vmem:[%s3 + $0x88] sm:$0xff]
    %v512 = vld [vmem:[%s3 + $0x90] sm:$0xff]
    %v513 = vld [vmem:[%s3 + $0x98] sm:$0xff]
    %v514 = vld [vmem:[%s3 + $0xa0] sm:$0xff]
    %v515 = vld [vmem:[%s3 + $0xa8] sm:$0xff]
    %v516 = vld [vmem:[%s3 + $0xb0] sm:$0xff]
    %v517 = vld [vmem:[%s3 + $0xb8] sm:$0xff]
    %v518 = vld [vmem:[%s3 + $0xc0] sm:$0xff]
    %v519 = vld [vmem:[%s3 + $0xc8] sm:$0xff]
    %v520 = vld [vmem:[%s3 + $0xd0] sm:$0xff]
    %v521 = vld [vmem:[%s3 + $0xd8] sm:$0xff]
    %v522 = vld [vmem:[%s3 + $0xe0] sm:$0xff]
    %v523 = vld [vmem:[%s3 + $0xe8] sm:$0xff]
    %v524 = vld [vmem:[%s3 + $0xf0] sm:$0xff]
    %v525 = vld [vmem:[%s3 + $0xf8] sm:$0xff]
    %v526 = vld [vmem:[%s3 + $0x100] sm:$0xff]
    %v527 = vld [vmem:[%s3 + $0x108] sm:$0xff]
    %v528 = vld [vmem:[%s3 + $0x110] sm:$0xff]
    %v529 = vld [vmem:[%s3 + $0x118] sm:$0xff]
    %v530 = vld [vmem:[%s3 + $0x120] sm:$0xff]
    %v531 = vld [vmem:[%s3 + $0x128] sm:$0xff]
    %v532 = vld [vmem:[%s3 + $0x130] sm:$0xff]
    %v533 = vld [vmem:[%s3 + $0x138] sm:$0xff]
    %v534 = vld [vmem:[%s3 + $0x140] sm:$0xff]
    %v535 = vld [vmem:[%s3 + $0x148] sm:$0xff]
    %v536 = vld [vmem:[%s3 + $0x150] sm:$0xff]
    %v537 = vld [vmem:[%s3 + $0x158] sm:$0xff]
    %v538 = vld [vmem:[%s3 + $0x160] sm:$0xff]
    %v539 = vld [vmem:[%s3 + $0x168] sm:$0xff]
    %v540 = vld [vmem:[%s3 + $0x170] sm:$0xff]
    %v541 = vld [vmem:[%s3 + $0x178] sm:$0xff]
    %v542 = vld [vmem:[%s3 + $0x180] sm:$0xff]
    %v543 = vld [vmem:[%s3 + $0x188] sm:$0xff]
    %v544 = vld [vmem:[%s3 + $0x190] sm:$0xff]
    %v545 = vld [vmem:[%s3 + $0x198] sm:$0xff]
    %v546 = vld [vmem:[%s3 + $0x1a0] sm:$0xff]
    %v547 = vld [vmem:[%s3 + $0x1a8] sm:$0xff]
    %v548 = vld [vmem:[%s3 + $0x1b0] sm:$0xff]
    %v549 = vld [vmem:[%s3 + $0x1b8] sm:$0xff]
    %v550 = vld [vmem:[%s3 + $0x1c0] sm:$0xff]
    %v551 = vld [vmem:[%s3 + $0x1c8] sm:$0xff]
    %v552 = vld [vmem:[%s3 + $0x1d0] sm:$0xff]
    %v553 = vld [vmem:[%s3 + $0x1d8] sm:$0xff]
    %v554 = vld [vmem:[%s3 + $0x1e0] sm:$0xff]
    %v555 = vld [vmem:[%s3 + $0x1e8] sm:$0xff]
    %v556 = vld [vmem:[%s3 + $0x1f0] sm:$0xff]
    %v557 = vld [vmem:[%s3 + $0x1f8] sm:$0xff]
    %v558 = vld [vmem:[%s4] sm:$0xff]
    %v559 = vld [vmem:[%s4 + $0x8] sm:$0xff]
    %v560 = vld [vmem:[%s4 + $0x10] sm:$0xff]
    %v561 = vld [vmem:[%s4 + $0x18] sm:$0xff]
    %v562 = vld [vmem:[%s4 + $0x20] sm:$0xff]
    %v563 = vld [vmem:[%s4 + $0x28] sm:$0xff]
    %v564 = vld [vmem:[%s4 + $0x30] sm:$0xff]
    %v565 = vld [vmem:[%s4 + $0x38] sm:$0xff]
    %v566 = vld [vmem:[%s4 + $0x40] sm:$0xff]
    %v567 = vld [vmem:[%s4 + $0x48] sm:$0xff]
    %v568 = vld [vmem:[%s4 + $0x50] sm:$0xff]
    %v569 = vld [vmem:[%s4 + $0x58] sm:$0xff]
    %v570 = vld [vmem:[%s4 + $0x60] sm:$0xff]
    %v571 = vld [vmem:[%s4 + $0x68] sm:$0xff]
    %v572 = vld [vmem:[%s4 + $0x70] sm:$0xff]
    %v573 = vld [vmem:[%s4 + $0x78] sm:$0xff]
    %v574 = vld [vmem:[%s4 + $0x80] sm:$0xff]
    %v575 = vld [vmem:[%s4 + $0x88] sm:$0xff]
    %v576 = vld [vmem:[%s4 + $0x90] sm:$0xff]
    %v577 = vld [vmem:[%s4 + $0x98] sm:$0xff]
    %v578 = vld [vmem:[%s4 + $0xa0] sm:$0xff]
    %v579 = vld [vmem:[%s4 + $0xa8] sm:$0xff]
    %v580 = vld [vmem:[%s4 + $0xb0] sm:$0xff]
    %v581 = vld [vmem:[%s4 + $0xb8] sm:$0xff]
    %v582 = vld [vmem:[%s4 + $0xc0] sm:$0xff]
    %v583 = vld [vmem:[%s4 + $0xc8] sm:$0xff]
    %v584 = vld [vmem:[%s4 + $0xd0] sm:$0xff]
    %v585 = vld [vmem:[%s4 + $0xd8] sm:$0xff]
    %v586 = vld [vmem:[%s4 + $0xe0] sm:$0xff]
    %v587 = vld [vmem:[%s4 + $0xe8] sm:$0xff]
    %v588 = vld [vmem:[%s4 + $0xf0] sm:$0xff]
    %v589 = vld [vmem:[%s4 + $0xf8] sm:$0xff]
    %591 = vset.pattern.permute.xlu0 0
    %592 = vperm.xlu0 %591, %v558
    %v593 = vpop.permute.xlu0 %592
    %596 = vset.pattern.permute.xlu0 0
    %597 = vperm.xlu0 %596, %v559
    %v598 = vpop.permute.xlu0 %597
    %601 = vset.pattern.permute.xlu0 0
    %602 = vperm.xlu0 %601, %v560
    %v603 = vpop.permute.xlu0 %602
    %606 = vset.pattern.permute.xlu0 0
    %607 = vperm.xlu0 %606, %v561
    %v608 = vpop.permute.xlu0 %607
    %611 = vset.pattern.permute.xlu0 0
    %612 = vperm.xlu0 %611, %v562
    %v613 = vpop.permute.xlu0 %612
    %616 = vset.pattern.permute.xlu0 0
    %617 = vperm.xlu0 %616, %v563
    %v618 = vpop.permute.xlu0 %617
    %621 = vset.pattern.permute.xlu0 0
    %622 = vperm.xlu0 %621, %v564
    %v623 = vpop.permute.xlu0 %622
    %626 = vset.pattern.permute.xlu0 0
    %627 = vperm.xlu0 %626, %v565
    %v628 = vpop.permute.xlu0 %627
    %631 = vset.pattern.permute.xlu0 0
    %632 = vperm.xlu0 %631, %v566
    %v633 = vpop.permute.xlu0 %632
    %636 = vset.pattern.permute.xlu0 0
    %637 = vperm.xlu0 %636, %v567
    %v638 = vpop.permute.xlu0 %637
    %641 = vset.pattern.permute.xlu0 0
    %642 = vperm.xlu0 %641, %v568
    %v643 = vpop.permute.xlu0 %642
    %646 = vset.pattern.permute.xlu0 0
    %647 = vperm.xlu0 %646, %v569
    %v648 = vpop.permute.xlu0 %647
    %651 = vset.pattern.permute.xlu0 0
    %652 = vperm.xlu0 %651, %v570
    %v653 = vpop.permute.xlu0 %652
    %656 = vset.pattern.permute.xlu0 0
    %657 = vperm.xlu0 %656, %v571
    %v658 = vpop.permute.xlu0 %657
    %661 = vset.pattern.permute.xlu0 0
    %662 = vperm.xlu0 %661, %v572
    %v663 = vpop.permute.xlu0 %662
    %666 = vset.pattern.permute.xlu0 0
    %667 = vperm.xlu0 %666, %v573
    %v668 = vpop.permute.xlu0 %667
    %671 = vset.pattern.permute.xlu0 0
    %672 = vperm.xlu0 %671, %v574
    %v673 = vpop.permute.xlu0 %672
    %676 = vset.pattern.permute.xlu0 0
    %677 = vperm.xlu0 %676, %v575
    %v678 = vpop.permute.xlu0 %677
    %681 = vset.pattern.permute.xlu0 0
    %682 = vperm.xlu0 %681, %v576
    %v683 = vpop.permute.xlu0 %682
    %686 = vset.pattern.permute.xlu0 0
    %687 = vperm.xlu0 %686, %v577
    %v688 = vpop.permute.xlu0 %687
    %691 = vset.pattern.permute.xlu0 0
    %692 = vperm.xlu0 %691, %v578
    %v693 = vpop.permute.xlu0 %692
    %696 = vset.pattern.permute.xlu0 0
    %697 = vperm.xlu0 %696, %v579
    %v698 = vpop.permute.xlu0 %697
    %701 = vset.pattern.permute.xlu0 0
    %702 = vperm.xlu0 %701, %v580
    %v703 = vpop.permute.xlu0 %702
    %706 = vset.pattern.permute.xlu0 0
    %707 = vperm.xlu0 %706, %v581
    %v708 = vpop.permute.xlu0 %707
    %711 = vset.pattern.permute.xlu0 0
    %712 = vperm.xlu0 %711, %v582
    %v713 = vpop.permute.xlu0 %712
    %716 = vset.pattern.permute.xlu0 0
    %717 = vperm.xlu0 %716, %v583
    %v718 = vpop.permute.xlu0 %717
    %721 = vset.pattern.permute.xlu0 0
    %722 = vperm.xlu0 %721, %v584
    %v723 = vpop.permute.xlu0 %722
    %726 = vset.pattern.permute.xlu0 0
    %727 = vperm.xlu0 %726, %v585
    %v728 = vpop.permute.xlu0 %727
    %731 = vset.pattern.permute.xlu0 0
    %732 = vperm.xlu0 %731, %v586
    %v733 = vpop.permute.xlu0 %732
    %736 = vset.pattern.permute.xlu0 0
    %737 = vperm.xlu0 %736, %v587
    %v738 = vpop.permute.xlu0 %737
    %741 = vset.pattern.permute.xlu0 0
    %742 = vperm.xlu0 %741, %v588
    %v743 = vpop.permute.xlu0 %742
    %746 = vset.pattern.permute.xlu0 0
    %747 = vperm.xlu0 %746, %v589
    %v748 = vpop.permute.xlu0 %747
    %750 = vmatpush.msra.mxu0 %v477
    %751 = vmatpush.msra.mxu0 %v476
    %752 = vmatpush.msra.mxu0 %v475
    %753 = vmatpush.msra.mxu0 %v474
    %754 = vmatpush.msra.mxu0 %v473
    %755 = vmatpush.msra.mxu0 %v472
    %756 = vmatpush.msra.mxu0 %v471
    %757 = vmatpush.msra.mxu0 %v470
    %758 = vmatpush.msra.mxu0 %v469
    %759 = vmatpush.msra.mxu0 %v468
    %760 = vmatpush.msra.mxu0 %v467
    %761 = vmatpush.msra.mxu0 %v466
    %762 = vmatpush.msra.mxu0 %v465
    %763 = vmatpush.msra.mxu0 %v464
    %764 = vmatpush.msra.mxu0 %v463
    %765 = vmatpush.msra.mxu0 %v462
    %766 = vmatmul.f32.gmra.mxu0 %v494
    %v767 = vpop.f32.mrf.mxu0
    %v768 = vadd.f32 %v593, %v767
    %769 = vmatmul.f32.gmra.mxu0 %v496
    %v770 = vpop.f32.mrf.mxu0
    %v771 = vadd.f32 %v598, %v770
    %772 = vmatmul.f32.gmra.mxu0 %v498
    %v773 = vpop.f32.mrf.mxu0
    %v774 = vadd.f32 %v603, %v773
    %775 = vmatmul.f32.gmra.mxu0 %v500
    %v776 = vpop.f32.mrf.mxu0
    %v777 = vadd.f32 %v608, %v776
    %778 = vmatmul.f32.gmra.mxu0 %v502
    %v779 = vpop.f32.mrf.mxu0
    %v780 = vadd.f32 %v613, %v779
    %781 = vmatmul.f32.gmra.mxu0 %v504
    %v782 = vpop.f32.mrf.mxu0
    %v783 = vadd.f32 %v618, %v782
    %784 = vmatmul.f32.gmra.mxu0 %v506
    %v785 = vpop.f32.mrf.mxu0
    %v786 = vadd.f32 %v623, %v785
    %787 = vmatmul.f32.gmra.mxu0 %v508
    %v788 = vpop.f32.mrf.mxu0
    %v789 = vadd.f32 %v628, %v788
    %790 = vmatmul.f32.gmra.mxu0 %v510
    %v791 = vpop.f32.mrf.mxu0
    %v792 = vadd.f32 %v633, %v791
    %793 = vmatmul.f32.gmra.mxu0 %v512
    %v794 = vpop.f32.mrf.mxu0
    %v795 = vadd.f32 %v638, %v794
    %796 = vmatmul.f32.gmra.mxu0 %v514
    %v797 = vpop.f32.mrf.mxu0
    %v798 = vadd.f32 %v643, %v797
    %799 = vmatmul.f32.gmra.mxu0 %v516
    %v800 = vpop.f32.mrf.mxu0
    %v801 = vadd.f32 %v648, %v800
    %802 = vmatmul.f32.gmra.mxu0 %v518
    %v803 = vpop.f32.mrf.mxu0
    %v804 = vadd.f32 %v653, %v803
    %805 = vmatmul.f32.gmra.mxu0 %v520
    %v806 = vpop.f32.mrf.mxu0
    %v807 = vadd.f32 %v658, %v806
    %808 = vmatmul.f32.gmra.mxu0 %v522
    %v809 = vpop.f32.mrf.mxu0
    %v810 = vadd.f32 %v663, %v809
    %811 = vmatmul.f32.gmra.mxu0 %v524
    %v812 = vpop.f32.mrf.mxu0
    %v813 = vadd.f32 %v668, %v812
    %814 = vmatmul.f32.gmra.mxu0 %v526
    %v815 = vpop.f32.mrf.mxu0
    %v816 = vadd.f32 %v673, %v815
    %817 = vmatmul.f32.gmra.mxu0 %v528
    %v818 = vpop.f32.mrf.mxu0
    %v819 = vadd.f32 %v678, %v818
    %820 = vmatmul.f32.gmra.mxu0 %v530
    %v821 = vpop.f32.mrf.mxu0
    %v822 = vadd.f32 %v683, %v821
    %823 = vmatmul.f32.gmra.mxu0 %v532
    %v824 = vpop.f32.mrf.mxu0
    %v825 = vadd.f32 %v688, %v824
    %826 = vmatmul.f32.gmra.mxu0 %v534
    %v827 = vpop.f32.mrf.mxu0
    %v828 = vadd.f32 %v693, %v827
    %829 = vmatmul.f32.gmra.mxu0 %v536
    %v830 = vpop.f32.mrf.mxu0
    %v831 = vadd.f32 %v698, %v830
    %832 = vmatmul.f32.gmra.mxu0 %v538
    %v833 = vpop.f32.mrf.mxu0
    %v834 = vadd.f32 %v703, %v833
    %835 = vmatmul.f32.gmra.mxu0 %v540
    %v836 = vpop.f32.mrf.mxu0
    %v837 = vadd.f32 %v708, %v836
    %838 = vmatmul.f32.gmra.mxu0 %v542
    %v839 = vpop.f32.mrf.mxu0
    %v840 = vadd.f32 %v713, %v839
    %841 = vmatmul.f32.gmra.mxu0 %v544
    %v842 = vpop.f32.mrf.mxu0
    %v843 = vadd.f32 %v718, %v842
    %844 = vmatmul.f32.gmra.mxu0 %v546
    %v845 = vpop.f32.mrf.mxu0
    %v846 = vadd.f32 %v723, %v845
    %847 = vmatmul.f32.gmra.mxu0 %v548
    %v848 = vpop.f32.mrf.mxu0
    %v849 = vadd.f32 %v728, %v848
    %850 = vmatmul.f32.gmra.mxu0 %v550
    %v851 = vpop.f32.mrf.mxu0
    %v852 = vadd.f32 %v733, %v851
    %853 = vmatmul.f32.gmra.mxu0 %v552
    %v854 = vpop.f32.mrf.mxu0
    %v855 = vadd.f32 %v738, %v854
    %856 = vmatmul.f32.gmra.mxu0 %v554
    %v857 = vpop.f32.mrf.mxu0
    %v858 = vadd.f32 %v743, %v857
    %859 = vmatmul.f32.gmra.mxu0 %v556
    %v860 = vpop.f32.mrf.mxu0
    %v861 = vadd.f32 %v748, %v860
    %862 = vdwg.mxu0
    %863 = vmatpush.msra.mxu0 %v493
    %864 = vmatpush.msra.mxu0 %v492
    %865 = vmatpush.msra.mxu0 %v491
    %866 = vmatpush.msra.mxu0 %v490
    %867 = vmatpush.msra.mxu0 %v489
    %868 = vmatpush.msra.mxu0 %v488
    %869 = vmatpush.msra.mxu0 %v487
    %870 = vmatpush.msra.mxu0 %v486
    %871 = vmatpush.msra.mxu0 %v485
    %872 = vmatpush.msra.mxu0 %v484
    %873 = vmatpush.msra.mxu0 %v483
    %874 = vmatpush.msra.mxu0 %v482
    %875 = vmatpush.msra.mxu0 %v481
    %876 = vmatpush.msra.mxu0 %v480
    %877 = vmatpush.msra.mxu0 %v479
    %878 = vmatpush.msra.mxu0 %v478
    %879 = vmatmul.f32.gmra.mxu0 %v495
    %v880 = vpop.f32.mrf.mxu0
    %v881 = vadd.f32 %v768, %v880
    %882 = vmatmul.f32.gmra.mxu0 %v497
    %v883 = vpop.f32.mrf.mxu0
    %v884 = vadd.f32 %v771, %v883
    %885 = vmatmul.f32.gmra.mxu0 %v499
    %v886 = vpop.f32.mrf.mxu0
    %v887 = vadd.f32 %v774, %v886
    %888 = vmatmul.f32.gmra.mxu0 %v501
    %v889 = vpop.f32.mrf.mxu0
    %v890 = vadd.f32 %v777, %v889
    %891 = vmatmul.f32.gmra.mxu0 %v503
    %v892 = vpop.f32.mrf.mxu0
    %v893 = vadd.f32 %v780, %v892
    %894 = vmatmul.f32.gmra.mxu0 %v505
    %v895 = vpop.f32.mrf.mxu0
    %v896 = vadd.f32 %v783, %v895
    %897 = vmatmul.f32.gmra.mxu0 %v507
    %v898 = vpop.f32.mrf.mxu0
    %v899 = vadd.f32 %v786, %v898
    %900 = vmatmul.f32.gmra.mxu0 %v509
    %v901 = vpop.f32.mrf.mxu0
    %v902 = vadd.f32 %v789, %v901
    %903 = vmatmul.f32.gmra.mxu0 %v511
    %v904 = vpop.f32.mrf.mxu0
    %v905 = vadd.f32 %v792, %v904
    %906 = vmatmul.f32.gmra.mxu0 %v513
    %v907 = vpop.f32.mrf.mxu0
    %v908 = vadd.f32 %v795, %v907
    %909 = vmatmul.f32.gmra.mxu0 %v515
    %v910 = vpop.f32.mrf.mxu0
    %v911 = vadd.f32 %v798, %v910
    %912 = vmatmul.f32.gmra.mxu0 %v517
    %v913 = vpop.f32.mrf.mxu0
    %v914 = vadd.f32 %v801, %v913
    %915 = vmatmul.f32.gmra.mxu0 %v519
    %v916 = vpop.f32.mrf.mxu0
    %v917 = vadd.f32 %v804, %v916
    %918 = vmatmul.f32.gmra.mxu0 %v521
    %v919 = vpop.f32.mrf.mxu0
    %v920 = vadd.f32 %v807, %v919
    %921 = vmatmul.f32.gmra.mxu0 %v523
    %v922 = vpop.f32.mrf.mxu0
    %v923 = vadd.f32 %v810, %v922
    %924 = vmatmul.f32.gmra.mxu0 %v525
    %v925 = vpop.f32.mrf.mxu0
    %v926 = vadd.f32 %v813, %v925
    %927 = vmatmul.f32.gmra.mxu0 %v527
    %v928 = vpop.f32.mrf.mxu0
    %v929 = vadd.f32 %v816, %v928
    %930 = vmatmul.f32.gmra.mxu0 %v529
    %v931 = vpop.f32.mrf.mxu0
    %v932 = vadd.f32 %v819, %v931
    %933 = vmatmul.f32.gmra.mxu0 %v531
    %v934 = vpop.f32.mrf.mxu0
    %v935 = vadd.f32 %v822, %v934
    %936 = vmatmul.f32.gmra.mxu0 %v533
    %v937 = vpop.f32.mrf.mxu0
    %v938 = vadd.f32 %v825, %v937
    %939 = vmatmul.f32.gmra.mxu0 %v535
    %v940 = vpop.f32.mrf.mxu0
    %v941 = vadd.f32 %v828, %v940
    %942 = vmatmul.f32.gmra.mxu0 %v537
    %v943 = vpop.f32.mrf.mxu0
    %v944 = vadd.f32 %v831, %v943
    %945 = vmatmul.f32.gmra.mxu0 %v539
    %v946 = vpop.f32.mrf.mxu0
    %v947 = vadd.f32 %v834, %v946
    %948 = vmatmul.f32.gmra.mxu0 %v541
    %v949 = vpop.f32.mrf.mxu0
    %v950 = vadd.f32 %v837, %v949
    %951 = vmatmul.f32.gmra.mxu0 %v543
    %v952 = vpop.f32.mrf.mxu0
    %v953 = vadd.f32 %v840, %v952
    %954 = vmatmul.f32.gmra.mxu0 %v545
    %v955 = vpop.f32.mrf.mxu0
    %v956 = vadd.f32 %v843, %v955
    %957 = vmatmul.f32.gmra.mxu0 %v547
    %v958 = vpop.f32.mrf.mxu0
    %v959 = vadd.f32 %v846, %v958
    %960 = vmatmul.f32.gmra.mxu0 %v549
    %v961 = vpop.f32.mrf.mxu0
    %v962 = vadd.f32 %v849, %v961
    %963 = vmatmul.f32.gmra.mxu0 %v551
    %v964 = vpop.f32.mrf.mxu0
    %v965 = vadd.f32 %v852, %v964
    %966 = vmatmul.f32.gmra.mxu0 %v553
    %v967 = vpop.f32.mrf.mxu0
    %v968 = vadd.f32 %v855, %v967
    %969 = vmatmul.f32.gmra.mxu0 %v555
    %v970 = vpop.f32.mrf.mxu0
    %v971 = vadd.f32 %v858, %v970
    %972 = vmatmul.f32.gmra.mxu0 %v557
    %v973 = vpop.f32.mrf.mxu0
    %v974 = vadd.f32 %v861, %v973
    %975 = vdwg.mxu0
    %v976 = vmax.f32 %v881, 0.0
    %v977 = vmax.f32 %v884, 0.0
    %v978 = vmax.f32 %v887, 0.0
    %v979 = vmax.f32 %v890, 0.0
    %v980 = vmax.f32 %v893, 0.0
    %v981 = vmax.f32 %v896, 0.0
    %v982 = vmax.f32 %v899, 0.0
    %v983 = vmax.f32 %v902, 0.0
    %v984 = vmax.f32 %v905, 0.0
    %v985 = vmax.f32 %v908, 0.0
    %v986 = vmax.f32 %v911, 0.0
    %v987 = vmax.f32 %v914, 0.0
    %v988 = vmax.f32 %v917, 0.0
    %v989 = vmax.f32 %v920, 0.0
    %v990 = vmax.f32 %v923, 0.0
    %v991 = vmax.f32 %v926, 0.0
    %v992 = vmax.f32 %v929, 0.0
    %v993 = vmax.f32 %v932, 0.0
    %v994 = vmax.f32 %v935, 0.0
    %v995 = vmax.f32 %v938, 0.0
    %v996 = vmax.f32 %v941, 0.0
    %v997 = vmax.f32 %v944, 0.0
    %v998 = vmax.f32 %v947, 0.0
    %v999 = vmax.f32 %v950, 0.0
    %v1000 = vmax.f32 %v953, 0.0
    %v1001 = vmax.f32 %v956, 0.0
    %v1002 = vmax.f32 %v959, 0.0
    %v1003 = vmax.f32 %v962, 0.0
    %v1004 = vmax.f32 %v965, 0.0
    %v1005 = vmax.f32 %v968, 0.0
    %v1006 = vmax.f32 %v971, 0.0
    %v1007 = vmax.f32 %v974, 0.0
    %v1008 = vld [vmem:[%s5] sm:$0xff]
    %v1009 = vld [vmem:[%s5 + $0x8] sm:$0xff]
    %v1010 = vld [vmem:[%s5 + $0x10] sm:$0xff]
    %v1011 = vld [vmem:[%s5 + $0x18] sm:$0xff]
    %v1012 = vld [vmem:[%s5 + $0x20] sm:$0xff]
    %v1013 = vld [vmem:[%s5 + $0x28] sm:$0xff]
    %v1014 = vld [vmem:[%s5 + $0x30] sm:$0xff]
    %v1015 = vld [vmem:[%s5 + $0x38] sm:$0xff]
    %v1016 = vld [vmem:[%s6] sm:$0xff]
    %v1017 = vld [vmem:[%s6 + $0x8] sm:$0xff]
    %v1018 = vld [vmem:[%s6 + $0x10] sm:$0xff]
    %v1019 = vld [vmem:[%s6 + $0x18] sm:$0xff]
    %1021 = vset.pattern.permute.xlu0 0
    %1022 = vperm.xlu0 %1021, %v1016
    %v1023 = vpop.permute.xlu0 %1022
    %1026 = vset.pattern.permute.xlu0 0
    %1027 = vperm.xlu0 %1026, %v1017
    %v1028 = vpop.permute.xlu0 %1027
    %1031 = vset.pattern.permute.xlu0 0
    %1032 = vperm.xlu0 %1031, %v1018
    %v1033 = vpop.permute.xlu0 %1032
    %1036 = vset.pattern.permute.xlu0 0
    %1037 = vperm.xlu0 %1036, %v1019
    %v1038 = vpop.permute.xlu0 %1037
    %1040 = vmatpush.msra.mxu0 %v991
    %1041 = vmatpush.msra.mxu0 %v990
    %1042 = vmatpush.msra.mxu0 %v989
    %1043 = vmatpush.msra.mxu0 %v988
    %1044 = vmatpush.msra.mxu0 %v987
    %1045 = vmatpush.msra.mxu0 %v986
    %1046 = vmatpush.msra.mxu0 %v985
    %1047 = vmatpush.msra.mxu0 %v984
    %1048 = vmatpush.msra.mxu0 %v983
    %1049 = vmatpush.msra.mxu0 %v982
    %1050 = vmatpush.msra.mxu0 %v981
    %1051 = vmatpush.msra.mxu0 %v980
    %1052 = vmatpush.msra.mxu0 %v979
    %1053 = vmatpush.msra.mxu0 %v978
    %1054 = vmatpush.msra.mxu0 %v977
    %1055 = vmatpush.msra.mxu0 %v976
    %1056 = vmatmul.f32.gmra.mxu0 %v1008
    %v1057 = vpop.f32.mrf.mxu0
    %v1058 = vadd.f32 %v1023, %v1057
    %1059 = vmatmul.f32.gmra.mxu0 %v1010
    %v1060 = vpop.f32.mrf.mxu0
    %v1061 = vadd.f32 %v1028, %v1060
    %1062 = vmatmul.f32.gmra.mxu0 %v1012
    %v1063 = vpop.f32.mrf.mxu0
    %v1064 = vadd.f32 %v1033, %v1063
    %1065 = vmatmul.f32.gmra.mxu0 %v1014
    %v1066 = vpop.f32.mrf.mxu0
    %v1067 = vadd.f32 %v1038, %v1066
    %1068 = vdwg.mxu0
    %1069 = vmatpush.msra.mxu0 %v1007
    %1070 = vmatpush.msra.mxu0 %v1006
    %1071 = vmatpush.msra.mxu0 %v1005
    %1072 = vmatpush.msra.mxu0 %v1004
    %1073 = vmatpush.msra.mxu0 %v1003
    %1074 = vmatpush.msra.mxu0 %v1002
    %1075 = vmatpush.msra.mxu0 %v1001
    %1076 = vmatpush.msra.mxu0 %v1000
    %1077 = vmatpush.msra.mxu0 %v999
    %1078 = vmatpush.msra.mxu0 %v998
    %1079 = vmatpush.msra.mxu0 %v997
    %1080 = vmatpush.msra.mxu0 %v996
    %1081 = vmatpush.msra.mxu0 %v995
    %1082 = vmatpush.msra.mxu0 %v994
    %1083 = vmatpush.msra.mxu0 %v993
    %1084 = vmatpush.msra.mxu0 %v992
    %1085 = vmatmul.f32.gmra.mxu0 %v1009
    %v1086 = vpop.f32.mrf.mxu0
    %v1087 = vadd.f32 %v1058, %v1086
    %1088 = vmatmul.f32.gmra.mxu0 %v1011
    %v1089 = vpop.f32.mrf.mxu0
    %v1090 = vadd.f32 %v1061, %v1089
    %1091 = vmatmul.f32.gmra.mxu0 %v1013
    %v1092 = vpop.f32.mrf.mxu0
    %v1093 = vadd.f32 %v1064, %v1092
    %1094 = vmatmul.f32.gmra.mxu0 %v1015
    %v1095 = vpop.f32.mrf.mxu0
    %v1096 = vadd.f32 %v1067, %v1095
    %1097 = vdwg.mxu0
    %v1098 = vmul.f32 %v1087, %v1093
    %v1099 = vadd.f32 %v1090, %v1098
    %v1100 = vmul.f32 %v1087, %v1087
    %v1101 = vmul.f32 %v1100, %v1096
    %v1102 = vadd.f32 %v1099, %v1101
    %1103 = vst [vmem:[#allocation2] sm:$0xff] %v1102
    // Predicated region
    $region30: #{tpu_custom_call.1} parent=1 // pred_check
      _
    $region31: #{tpu_custom_call.1} parent=1 // pred_check_branch
      %1105 = sbr.rel (0) target = $region33
    $region32: #{tpu_custom_call.1} parent=1 // pred_region
      %1107 = vsyncadd [#allocation3], 0
      %s1109 = sshll.u32 [#allocation2], 4
      %s1110 = int_to_ptr.vmem [resolvable:$true] %s1109
      %s1111 = sshll.u32 %s7, 4
      %s1112 = int_to_ptr.hbm [resolvable:$true] %s1111
      %1114 = dma.vmem_to_hbm [thread:$0]  %s1110, 128, %s1112, [#allocation3]
    $region33: #{tpu_custom_call.1} parent=1 // pred_fallthru
      _
    // Predicated region
    $region34: #{tpu_custom_call.1} parent=1 // pred_check
      _
    $region35: #{tpu_custom_call.1} parent=1 // pred_check_branch
      %1116 = sbr.rel (0) target = $region37
    $region36: #{tpu_custom_call.1} parent=1 // pred_region
      %1118 = dma.done [#allocation3], 128
    $region37: #{tpu_custom_call.1} parent=1 // pred_fallthru
      _
    %1119 = vsyncpa [#allocation3], 1

</llo_original>
